<compile_context>
chip_gen: v6e
topology: v6e:2x2x1
jax: 0.10.0
libtpu: 0.0.40
codegen_flags: <defaults>
</compile_context>

<pallas_src>
import functools

import jax
import jax.numpy as jnp
from jax import lax
from jax.experimental import pallas as pl
from jax.experimental.pallas import tpu as pltpu

DEFAULT_TILE_N = 512  # rows per grid step; sweep 512-2048 for production shapes


def _round_up(x, m):
    return ((x + m - 1) // m) * m


def _kencoder_train_kernel(x_ref, eps_ref, wmulv_ref, bmulv_ref,
                           wproj_ref, bproj_ref, k_ref, *, latent_dim):
    x = x_ref[...]                                             # (TILE_N, in_dim)
    # Fused k_mu / k_logvar: one MXU pass -> (TILE_N, 2*latent_dim).
    mulv = jnp.dot(x, wmulv_ref[...],
                   preferred_element_type=jnp.float32) + bmulv_ref[...]
    mu = mulv[:, :latent_dim]
    logvar = mulv[:, latent_dim:]
    # Reparameterized sample: eps * exp(0.5*logvar) + mu  (VPU/EUP, f32).
    latent = eps_ref[...] * jnp.exp(0.5 * logvar) + mu         # (TILE_N, L)
    # Projection to 1 output, produced lane-dense as a (1, TILE_N) row:
    # contract w_proj (1, L) with latent (TILE_N, L) over L.
    k_row = lax.dot_general(wproj_ref[...], latent,
                            dimension_numbers=(((1,), (1,)), ((), ())),
                            preferred_element_type=jnp.float32)  # (1, TILE_N)
    k_ref[...] = (k_row + bproj_ref[...]).astype(k_ref.dtype)


def _kencoder_eval_kernel(x_ref, wmu_ref, bmu_ref, wproj_ref, bproj_ref, k_ref):
    # latent_sample returns mu in eval mode; stochastic_k=False also uses mu.
    x = x_ref[...]                                             # (TILE_N, in_dim)
    mu = jnp.dot(x, wmu_ref[...],
                 preferred_element_type=jnp.float32) + bmu_ref[...]
    k_row = lax.dot_general(wproj_ref[...], mu,
                            dimension_numbers=(((1,), (1,)), ((), ())),
                            preferred_element_type=jnp.float32)  # (1, TILE_N)
    k_ref[...] = (k_row + bproj_ref[...]).astype(k_ref.dtype)


def learnable_k_encoder(x, params, eps=None, *, stochastic_k=True,
                        training=True, tile_n=DEFAULT_TILE_N):
    """x: (batch, seq, in_dim) f32.  Returns k: (batch, seq, 1) f32."""
    b, s, in_dim = x.shape
    latent_dim = params["w_mu"].shape[1]
    n = b * s

    # Row tile: large for pipelining, clamped (and 8-aligned) for tiny inputs.
    tile_n = min(tile_n, _round_up(n, 8))
    n_pad = _round_up(n, tile_n)
    grid_n = n_pad // tile_n

    x2d = x.reshape(n, in_dim)
    if n_pad != n:
        x2d = jnp.pad(x2d, ((0, n_pad - n), (0, 0)))

    full = lambda shape: pl.BlockSpec(shape, lambda i: (0,) * len(shape))
    out_spec = pl.BlockSpec((None, 1, tile_n), lambda i: (i, 0, 0))
    out_shape = jax.ShapeDtypeStruct((grid_n, 1, tile_n), jnp.float32)
    compiler_params = pltpu.CompilerParams(
        dimension_semantics=("parallel",),
        vmem_limit_bytes=32 * 1024 * 1024,
    )

    w_proj = params["w_proj"]   # (1, latent_dim)  -- nn.Linear weight layout
    b_proj = params["b_proj"]   # (1, 1)

    use_reparam = stochastic_k and training
    if use_reparam:
        if eps is None:
            raise ValueError("eps is required when stochastic_k and training")
        eps2d = eps.reshape(n, latent_dim)
        if n_pad != n:
            eps2d = jnp.pad(eps2d, ((0, n_pad - n), (0, 0)))
        # Fuse mu / logvar weights -> single (in_dim, 2*latent_dim) matmul.
        w_mulv = jnp.concatenate([params["w_mu"], params["w_logvar"]], axis=1)
        b_mulv = jnp.concatenate([params["b_mu"], params["b_logvar"]], axis=1)

        cost = pl.CostEstimate(
            flops=2 * n_pad * in_dim * 2 * latent_dim
                  + 2 * n_pad * latent_dim + 4 * n_pad * latent_dim,
            transcendentals=n_pad * latent_dim,
            bytes_accessed=4 * (n_pad * (in_dim + latent_dim + 1)
                                + in_dim * 2 * latent_dim + 3 * latent_dim + 1),
        )
        kernel = functools.partial(_kencoder_train_kernel,
                                   latent_dim=latent_dim)
        k3 = pl.pallas_call(
            kernel,
            out_shape=out_shape,
            grid=(grid_n,),
            in_specs=[
                pl.BlockSpec((tile_n, in_dim), lambda i: (i, 0)),      # x rows
                pl.BlockSpec((tile_n, latent_dim), lambda i: (i, 0)),  # eps rows
                full((in_dim, 2 * latent_dim)),   # [W_mu^T | W_logvar^T]
                full((1, 2 * latent_dim)),        # [b_mu | b_logvar]
                full((1, latent_dim)),            # W_proj row
                full((1, 1)),                     # b_proj
            ],
            out_specs=out_spec,
            compiler_params=compiler_params,
            cost_estimate=cost,
        )(x2d, eps2d, w_mulv, b_mulv, w_proj, b_proj)
    else:
        # No eps / logvar HBM traffic on this path at all.
        cost = pl.CostEstimate(
            flops=2 * n_pad * in_dim * latent_dim + 2 * n_pad * latent_dim,
            transcendentals=0,
            bytes_accessed=4 * (n_pad * (in_dim + 1)
                                + in_dim * latent_dim + 2 * latent_dim + 1),
        )
        k3 = pl.pallas_call(
            _kencoder_eval_kernel,
            out_shape=out_shape,
            grid=(grid_n,),
            in_specs=[
                pl.BlockSpec((tile_n, in_dim), lambda i: (i, 0)),      # x rows
                full((in_dim, latent_dim)),       # W_mu^T
                full((1, latent_dim)),            # b_mu
                full((1, latent_dim)),            # W_proj row
                full((1, 1)),                     # b_proj
            ],
            out_specs=out_spec,
            compiler_params=compiler_params,
            cost_estimate=cost,
        )(x2d, params["w_mu"], params["b_mu"], w_proj, b_proj)

    k_flat = k3.reshape(n_pad)[:n]
    return k_flat.reshape(b, s, 1)


def init_params(key, in_dim, latent_dim):
    """Deterministic synthetic init matching nn.Linear shapes.

    w_mu / w_logvar are stored transposed (in_dim, latent_dim) for row-major
    matmuls; w_proj is stored in nn.Linear layout (1, latent_dim).
    """
    ks = jax.random.split(key, 6)
    scale_in = 1.0 / jnp.sqrt(in_dim)
    scale_lat = 1.0 / jnp.sqrt(latent_dim)
    return {
        "w_mu":     jax.random.uniform(ks[0], (in_dim, latent_dim), jnp.float32,
                                       -scale_in, scale_in),
        "b_mu":     jax.random.uniform(ks[1], (1, latent_dim), jnp.float32,
                                       -scale_in, scale_in),
        "w_logvar": jax.random.uniform(ks[2], (in_dim, latent_dim), jnp.float32,
                                       -scale_in, scale_in),
        "b_logvar": jax.random.uniform(ks[3], (1, latent_dim), jnp.float32,
                                       -scale_in, scale_in),
        "w_proj":   jax.random.uniform(ks[4], (1, latent_dim), jnp.float32,
                                       -scale_lat, scale_lat),
        "b_proj":   jax.random.uniform(ks[5], (1, 1), jnp.float32,
                                       -scale_lat, scale_lat),
    }


def reference(x, params, eps, *, stochastic_k=True, training=True):
    mu = x @ params["w_mu"] + params["b_mu"][0]
    if stochastic_k and training:
        logvar = x @ params["w_logvar"] + params["b_logvar"][0]
        latent = eps * jnp.exp(0.5 * logvar) + mu
    else:
        latent = mu
    return latent @ params["w_proj"].T + params["b_proj"][0]


if __name__ == "__main__":
    key = jax.random.PRNGKey(0)
    k_param, k_x, k_eps = jax.random.split(key, 3)

    batch, seq, in_dim, latent_dim = 2, 8, 32, 16

    params = init_params(k_param, in_dim, latent_dim)
    x = jax.random.normal(k_x, (batch, seq, in_dim), jnp.float32)
    # eps drawn in the wrapper (deterministic, matches the reference); the
    # reparameterization math (exp, scale, shift) happens inside the kernel.
    # (Optional alternative: pltpu.prng_seed + pltpu.stateful_normal in-kernel,
    #  but that changes the RNG stream vs the reference.)
    eps = jax.random.normal(k_eps, (batch, seq, latent_dim), jnp.float32)

    # stochastic_k=True, training=True (full reparameterized sample)
    k_out = learnable_k_encoder(x, params, eps, stochastic_k=True, training=True)
    jax.block_until_ready(k_out)
    ref = reference(x, params, eps, stochastic_k=True, training=True)
    assert k_out.shape == (batch, seq, 1)
    assert jnp.allclose(k_out, ref, atol=1e-5, rtol=1e-5), "train mismatch"

    # eval path (latent_sample returns mu) -- no eps / logvar streamed
    k_eval = learnable_k_encoder(x, params, stochastic_k=True, training=False)
    jax.block_until_ready(k_eval)
    ref_eval = reference(x, params, eps, stochastic_k=True, training=False)
    assert jnp.allclose(k_eval, ref_eval, atol=1e-5, rtol=1e-5), "eval mismatch"

    # stochastic_k=False path shares the mu-only kernel
    k_det = learnable_k_encoder(x, params, stochastic_k=False, training=True)
    jax.block_until_ready(k_det)
    assert jnp.allclose(k_det, ref_eval, atol=1e-5, rtol=1e-5), "det mismatch"

    print("KERNEL_OK")
</pallas_src>

<mosaic_0001>
module attributes {stable_mosaic.version = 11 : i64} {
  func.func @_kencoder_train_kernel(%arg0: i32, %arg1: memref<16x32xf32, #tpu.memory_space<vmem>>, %arg2: memref<16x16xf32, #tpu.memory_space<vmem>>, %arg3: memref<32x32xf32, #tpu.memory_space<vmem>>, %arg4: memref<1x32xf32, #tpu.memory_space<vmem>>, %arg5: memref<1x16xf32, #tpu.memory_space<vmem>>, %arg6: memref<1x1xf32, #tpu.memory_space<vmem>>, %arg7: memref<1x1x16xf32, #tpu.memory_space<vmem>>) attributes {dimension_semantics = [#tpu.dimension_semantics<parallel>], iteration_bounds = array<i64: 1>, scalar_prefetch = 0 : i64, scratch_operands = 0 : i64, tpu.core_type = #tpu.core_type<tc>, window_params = [{transform_indices = @transform_0, window_bounds = array<i64: 16, 32>}, {transform_indices = @transform_1, window_bounds = array<i64: 16, 16>}, {pipeline_mode = #tpu.pipeline_mode<synchronous>, transform_indices = @transform_2, window_bounds = array<i64: 32, 32>}, {pipeline_mode = #tpu.pipeline_mode<synchronous>, transform_indices = @transform_3, window_bounds = array<i64: 1, 32>}, {pipeline_mode = #tpu.pipeline_mode<synchronous>, transform_indices = @transform_4, window_bounds = array<i64: 1, 16>}, {pipeline_mode = #tpu.pipeline_mode<synchronous>, transform_indices = @transform_5, window_bounds = array<i64: 1, 1>}, {transform_indices = @transform_6, window_bounds = array<i64: 1, 1, 16>}]} {
    %c0 = arith.constant 0 : index
    %c0_0 = arith.constant 0 : index
    %0 = vector.load %arg1[%c0, %c0_0] : memref<16x32xf32, #tpu.memory_space<vmem>>, vector<16x32xf32>
    %c0_1 = arith.constant 0 : index
    %c0_2 = arith.constant 0 : index
    %1 = vector.load %arg3[%c0_1, %c0_2] : memref<32x32xf32, #tpu.memory_space<vmem>>, vector<32x32xf32>
    %cst = arith.constant dense<0.000000e+00> : vector<16x32xf32>
    %2 = tpu.matmul %0, %1, %cst {dimension_numbers = #tpu.dot_dimension_numbers<[1], [0], [0], [1], [0, 0, 1, 1], [], []>} : vector<16x32xf32>, vector<32x32xf32>, vector<16x32xf32> -> vector<16x32xf32>
    %c0_3 = arith.constant 0 : index
    %c0_4 = arith.constant 0 : index
    %3 = vector.load %arg4[%c0_3, %c0_4] : memref<1x32xf32, #tpu.memory_space<vmem>>, vector<1x32xf32>
    %4 = vector.broadcast %3 : vector<1x32xf32> to vector<16x32xf32>
    %5 = arith.addf %2, %4 : vector<16x32xf32>
    %6 = vector.extract_strided_slice %5 {offsets = [0, 0], sizes = [16, 16], strides = [1, 1]} : vector<16x32xf32> to vector<16x16xf32>
    %7 = vector.extract_strided_slice %5 {offsets = [0, 16], sizes = [16, 16], strides = [1, 1]} : vector<16x32xf32> to vector<16x16xf32>
    %c0_5 = arith.constant 0 : index
    %c0_6 = arith.constant 0 : index
    %8 = vector.load %arg2[%c0_5, %c0_6] : memref<16x16xf32, #tpu.memory_space<vmem>>, vector<16x16xf32>
    %cst_7 = arith.constant 5.000000e-01 : f32
    %9 = vector.broadcast %cst_7 : f32 to vector<16x16xf32>
    %10 = arith.mulf %9, %7 : vector<16x16xf32>
    %11 = math.exp %10 : vector<16x16xf32>
    %12 = arith.mulf %8, %11 : vector<16x16xf32>
    %13 = arith.addf %12, %6 : vector<16x16xf32>
    %c0_8 = arith.constant 0 : index
    %c0_9 = arith.constant 0 : index
    %14 = vector.load %arg5[%c0_8, %c0_9] : memref<1x16xf32, #tpu.memory_space<vmem>>, vector<1x16xf32>
    %cst_10 = arith.constant dense<0.000000e+00> : vector<1x16xf32>
    %15 = tpu.matmul %14, %13, %cst_10 {dimension_numbers = #tpu.dot_dimension_numbers<[1], [1], [0], [0], [0, 0, 1, 0], [], []>} : vector<1x16xf32>, vector<16x16xf32>, vector<1x16xf32> -> vector<1x16xf32>
    %c0_11 = arith.constant 0 : index
    %c0_12 = arith.constant 0 : index
    %16 = vector.load %arg6[%c0_11, %c0_12] : memref<1x1xf32, #tpu.memory_space<vmem>>, vector<1x1xf32>
    %17 = vector.broadcast %16 : vector<1x1xf32> to vector<1x16xf32>
    %18 = arith.addf %15, %17 : vector<1x16xf32>
    %c0_13 = arith.constant 0 : index
    %c0_14 = arith.constant 0 : index
    %c0_15 = arith.constant 0 : index
    %19 = vector.load %arg7[%c0_13, %c0_14, %c0_15] : memref<1x1x16xf32, #tpu.memory_space<vmem>>, vector<1x1x16xf32>
    %20 = vector.shape_cast %19 : vector<1x1x16xf32> to vector<1x16xf32>
    %21 = vector.shape_cast %18 : vector<1x16xf32> to vector<1x1x16xf32>
    tpu.vector_store %arg7[%c0_13, %c0_14, %c0_15], %21 {strides = array<i32>} : memref<1x1x16xf32, #tpu.memory_space<vmem>>, vector<1x1x16xf32>,
    return
  }
  func.func @transform_0(%arg0: i32) -> (i32, i32) {
    %c0_i32 = arith.constant 0 : i32
    %c0_i32_0 = arith.constant 0 : i32
    return %arg0, %c0_i32 : i32, i32
  }
  func.func @transform_1(%arg0: i32) -> (i32, i32) {
    %c0_i32 = arith.constant 0 : i32
    %c0_i32_0 = arith.constant 0 : i32
    return %arg0, %c0_i32 : i32, i32
  }
  func.func @transform_2(%arg0: i32) -> (i32, i32) {
    %c0_i32 = arith.constant 0 : i32
    %c0_i32_0 = arith.constant 0 : i32
    %c0_i32_1 = arith.constant 0 : i32
    return %c0_i32, %c0_i32_0 : i32, i32
  }
  func.func @transform_3(%arg0: i32) -> (i32, i32) {
    %c0_i32 = arith.constant 0 : i32
    %c0_i32_0 = arith.constant 0 : i32
    %c0_i32_1 = arith.constant 0 : i32
    return %c0_i32, %c0_i32_0 : i32, i32
  }
  func.func @transform_4(%arg0: i32) -> (i32, i32) {
    %c0_i32 = arith.constant 0 : i32
    %c0_i32_0 = arith.constant 0 : i32
    %c0_i32_1 = arith.constant 0 : i32
    return %c0_i32, %c0_i32_0 : i32, i32
  }
  func.func @transform_5(%arg0: i32) -> (i32, i32) {
    %c0_i32 = arith.constant 0 : i32
    %c0_i32_0 = arith.constant 0 : i32
    %c0_i32_1 = arith.constant 0 : i32
    return %c0_i32, %c0_i32_0 : i32, i32
  }
  func.func @transform_6(%arg0: i32) -> (i32, i32, i32) {
    %c0_i32 = arith.constant 0 : i32
    %c0_i32_0 = arith.constant 0 : i32
    %c0_i32_1 = arith.constant 0 : i32
    return %arg0, %c0_i32, %c0_i32_0 : i32, i32, i32
  }
}

</mosaic_0001>

<llo_original>
// kernel: tpu_custom_call.1
$region0: #{tpu_custom_call.1}
  #allocation0 [shape = 'u32[]', space=smem, size = 0x4, offset = 0x4, fixed_abs, tag = 'smem constant byte address 0x4 - core index']
  #allocation1 [shape = 'u32[144,128]{1,0:T(1,128)}', space=vmem, size = 0x12000, scoped, tag = 'internal scratch']
  #allocation2 [shape = 'f32[1,1]{1,0:T(1,128)S(1)}', space=vmem, size = 0x200, scoped, tag = 'scoped memory for tpu_custom_call.1']
  %s0 = inlined_call_operand.hbm [shape: f32[16,32], index: 0, kind: input, shape index: {}]
  %s1 = inlined_call_operand.hbm [shape: f32[16,16], index: 1, kind: input, shape index: {}]
  %s2 = inlined_call_operand.hbm [shape: f32[32,32], index: 2, kind: input, shape index: {}]
  %s3 = inlined_call_operand.vmem [shape: f32[1,32], index: 3, kind: input, shape index: {}]
  %s4 = inlined_call_operand.vmem [shape: f32[1,16], index: 4, kind: input, shape index: {}]
  %s5 = inlined_call_operand.<no memory space> [shape: f32[1,1], index: 5, kind: input, shape index: {}]
  %s6 = inlined_call_operand.hbm [shape: f32[1,1,16], index: 6, kind: output, shape index: {}]
  %s7 = sld [smem:[#allocation0]]
  $region46: #{tpu_custom_call.1} parent=0
    _
  %s9 = ssub.s32 1, %s7
  %s10 = scalar_select 0, %s9, %s7
  %v11 = vstv %s5
  %12 = vst [vmem:[#allocation2] sm:$0x1] %v11
  $region1: #{tpu_custom_call.1} parent=0
    #allocation3 [shape = 'u8[8192]{0}', space=vmem, size = 0x2000, scoped, tag = 'input window, operand 0, single buffered']
    #allocation4 [shape = 's32[1]{0}', space=sflag, size = 0x4, scoped, tag = 'scoped memory for tpu_custom_call.1']
    #allocation5 [shape = 's32[1]{0}', space=sflag, size = 0x4, scoped, tag = 'scoped memory for tpu_custom_call.1']
    #allocation6 [shape = 'u8[8192]{0}', space=vmem, size = 0x2000, scoped, tag = 'input window, operand 1, single buffered']
    #allocation7 [shape = 's32[1]{0}', space=sflag, size = 0x4, scoped, tag = 'scoped memory for tpu_custom_call.1']
    #allocation8 [shape = 'u8[16384]{0}', space=vmem, size = 0x4000, scoped, tag = 'input window, operand 2, single buffered']
    #allocation9 [shape = 'u8[512]{0}', space=vmem, size = 0x400, scoped, tag = 'output window, operand 0, single buffered']
    %13 = vsyncpa [#allocation4], 0
    %14 = vsyncpa [#allocation7], 0
    %15 = vsyncpa [#allocation5], 0
    // Predicated region
    $region2: #{tpu_custom_call.1} parent=1 // pred_check
      _
    $region3: #{tpu_custom_call.1} parent=1 // pred_check_branch
      %17 = sbr.rel (0) target = $region5
    $region4: #{tpu_custom_call.1} parent=1 // pred_region
      %s19 = ssub.s32 256, 256
      %20 = vsyncadd [#allocation4], %s19
      %s21 = sshll.u32 [#allocation3], 4
      %s22 = int_to_ptr.vmem [resolvable:$true] %s21
      %27 = dma.hbm_to_vmem [thread:$0]  %s0, 256, %s22, [#allocation4], 128, 128, 8
    $region5: #{tpu_custom_call.1} parent=1 // pred_fallthru
      _
    // Predicated region
    $region6: #{tpu_custom_call.1} parent=1 // pred_check
      _
    $region7: #{tpu_custom_call.1} parent=1 // pred_check_branch
      %29 = sbr.rel (0) target = $region9
    $region8: #{tpu_custom_call.1} parent=1 // pred_region
      %s31 = ssub.s32 256, 256
      %32 = vsyncadd [#allocation7], %s31
      %s33 = sshll.u32 [#allocation6], 4
      %s34 = int_to_ptr.vmem [resolvable:$true] %s33
      %39 = dma.hbm_to_vmem [thread:$0]  %s1, 256, %s34, [#allocation7], 128, 128, 8
    $region9: #{tpu_custom_call.1} parent=1 // pred_fallthru
      _
    // Predicated region
    $region10: #{tpu_custom_call.1} parent=1 // pred_check
      _
    $region11: #{tpu_custom_call.1} parent=1 // pred_check_branch
      %41 = sbr.rel (0) target = $region13
    $region12: #{tpu_custom_call.1} parent=1 // pred_region
      %s43 = ssub.s32 512, 512
      %44 = vsyncadd [#allocation7], %s43
      %s45 = sshll.u32 [#allocation8], 4
      %s46 = int_to_ptr.vmem [resolvable:$true] %s45
      %51 = dma.hbm_to_vmem [thread:$0]  %s2, 512, %s46, [#allocation7], 128, 128, 8
    $region13: #{tpu_custom_call.1} parent=1 // pred_fallthru
      _
    // Predicated region
    $region14: #{tpu_custom_call.1} parent=1 // pred_check
      _
    $region15: #{tpu_custom_call.1} parent=1 // pred_check_branch
      %53 = sbr.rel (0) target = $region17
    $region16: #{tpu_custom_call.1} parent=1 // pred_region
      _
    $region17: #{tpu_custom_call.1} parent=1 // pred_fallthru
      _
    // Predicated region
    $region18: #{tpu_custom_call.1} parent=1 // pred_check
      _
    $region19: #{tpu_custom_call.1} parent=1 // pred_check_branch
      %55 = sbr.rel (0) target = $region21
    $region20: #{tpu_custom_call.1} parent=1 // pred_region
      _
    $region21: #{tpu_custom_call.1} parent=1 // pred_fallthru
      _
    // Predicated region
    $region22: #{tpu_custom_call.1} parent=1 // pred_check
      _
    $region23: #{tpu_custom_call.1} parent=1 // pred_check_branch
      %57 = sbr.rel (0) target = $region25
    $region24: #{tpu_custom_call.1} parent=1 // pred_region
      _
    $region25: #{tpu_custom_call.1} parent=1 // pred_fallthru
      _
    // Predicated region
    $region26: #{tpu_custom_call.1} parent=1 // pred_check
      _
    $region27: #{tpu_custom_call.1} parent=1 // pred_check_branch
      %59 = sbr.rel (0) target = $region29
    $region28: #{tpu_custom_call.1} parent=1 // pred_region
      %60 = dma.done [#allocation4], 256
    $region29: #{tpu_custom_call.1} parent=1 // pred_fallthru
      _
    // Predicated region
    $region30: #{tpu_custom_call.1} parent=1 // pred_check
      _
    $region31: #{tpu_custom_call.1} parent=1 // pred_check_branch
      %62 = sbr.rel (0) target = $region33
    $region32: #{tpu_custom_call.1} parent=1 // pred_region
      %63 = dma.done [#allocation7], 256
    $region33: #{tpu_custom_call.1} parent=1 // pred_fallthru
      _
    // Predicated region
    $region34: #{tpu_custom_call.1} parent=1 // pred_check
      _
    $region35: #{tpu_custom_call.1} parent=1 // pred_check_branch
      %65 = sbr.rel (0) target = $region37
    $region36: #{tpu_custom_call.1} parent=1 // pred_region
      %66 = dma.done [#allocation7], 512
    $region37: #{tpu_custom_call.1} parent=1 // pred_fallthru
      _
    %v67 = vld [vmem:[#allocation3] sm:$0xff]
    %v68 = vld [vmem:[#allocation3 + $0x8] sm:$0xff]
    %v69 = vld [vmem:[#allocation8] sm:$0xff]
    %v70 = vld [vmem:[#allocation8 + $0x8] sm:$0xff]
    %v71 = vld [vmem:[#allocation8 + $0x10] sm:$0xff]
    %v72 = vld [vmem:[#allocation8 + $0x18] sm:$0xff]
    %v73 = vld [vmem:[%s3] sm:$0x1]
    %v75 = vlaneseq
    %v76 = vshrl.u32 %v75, 7
    %v77 = vsub.s32 0, %v76
    %v78 = vrot.slane %v73, %v77
    %vm80 = vcmask 261120
    %v82 = vsel %vm80, %v67, 0
    %v85 = vsel %vm80, %v68, 0
    %87 = vmatprep.subr.mxu0 0.0
    %88 = vmatpush1.msra.mxu0 0.0
    %89 = vmatprep.subr.mxu0 0.0
    %90 = vmatpush1.msra.mxu0 0.0
    %91 = vmatprep.subr.mxu0 0.0
    %92 = vmatpush1.msra.mxu0 0.0
    %93 = vmatprep.subr.mxu0 0.0
    %94 = vmatpush1.msra.mxu0 0.0
    %95 = vmatprep.subr.mxu0 0.0
    %96 = vmatpush1.msra.mxu0 0.0
    %97 = vmatprep.subr.mxu0 0.0
    %98 = vmatpush1.msra.mxu0 0.0
    %99 = vmatprep.subr.mxu0 0.0
    %100 = vmatpush1.msra.mxu0 0.0
    %101 = vmatprep.subr.mxu0 0.0
    %102 = vmatpush1.msra.mxu0 0.0
    %103 = vmatprep.subr.mxu0 0.0
    %104 = vmatpush1.msra.mxu0 0.0
    %105 = vmatprep.subr.mxu0 0.0
    %106 = vmatpush1.msra.mxu0 0.0
    %107 = vmatprep.subr.mxu0 0.0
    %108 = vmatpush1.msra.mxu0 0.0
    %109 = vmatprep.subr.mxu0 0.0
    %110 = vmatpush1.msra.mxu0 0.0
    %111 = vmatprep.subr.mxu0 0.0
    %112 = vmatpush1.msra.mxu0 %v72
    %113 = vmatprep.subr.mxu0 0.0
    %114 = vmatpush1.msra.mxu0 %v71
    %115 = vmatprep.subr.mxu0 0.0
    %116 = vmatpush1.msra.mxu0 %v70
    %117 = vmatprep.subr.mxu0 0.0
    %118 = vmatpush1.msra.mxu0 %v69
    %119 = vmatprep.subr.mxu0 0.0
    %120 = vmatpush2.msra.mxu0 0.0
    %121 = vmatprep.subr.mxu0 0.0
    %122 = vmatpush2.msra.mxu0 0.0
    %123 = vmatprep.subr.mxu0 0.0
    %124 = vmatpush2.msra.mxu0 0.0
    %125 = vmatprep.subr.mxu0 0.0
    %126 = vmatpush2.msra.mxu0 0.0
    %127 = vmatprep.subr.mxu0 0.0
    %128 = vmatpush2.msra.mxu0 0.0
    %129 = vmatprep.subr.mxu0 0.0
    %130 = vmatpush2.msra.mxu0 0.0
    %131 = vmatprep.subr.mxu0 0.0
    %132 = vmatpush2.msra.mxu0 0.0
    %133 = vmatprep.subr.mxu0 0.0
    %134 = vmatpush2.msra.mxu0 0.0
    %135 = vmatprep.subr.mxu0 0.0
    %136 = vmatpush2.msra.mxu0 0.0
    %137 = vmatprep.subr.mxu0 0.0
    %138 = vmatpush2.msra.mxu0 0.0
    %139 = vmatprep.subr.mxu0 0.0
    %140 = vmatpush2.msra.mxu0 0.0
    %141 = vmatprep.subr.mxu0 0.0
    %142 = vmatpush2.msra.mxu0 0.0
    %143 = vmatprep.subr.mxu0 0.0
    %144 = vmatpush2.msra.mxu0 0.0
    %145 = vmatprep.subr.mxu0 0.0
    %146 = vmatpush2.msra.mxu0 0.0
    %147 = vmatprep.subr.mxu0 0.0
    %148 = vmatpush2.msra.mxu0 0.0
    %149 = vmatprep.subr.mxu0 0.0
    %150 = vmatpush2.msra.mxu0 0.0
    %151 = vmatprep.mubr.f32.mxu0 0.0
    %152 = vmatmul.mubr.f32.gmra.mxu0 %v82
    %v153 = vpop.f32.mrf.mxu0
    %v154 = vadd.f32 %v78, %v153
    %v155 = vpop.f32.mrf.mxu0
    %156 = vmatprep.mubr.f32.mxu0 0.0
    %157 = vmatmul.mubr.f32.gmra.mxu0 %v85
    %v158 = vpop.f32.mrf.mxu0
    %v159 = vadd.f32 %v78, %v158
    %v160 = vpop.f32.mrf.mxu0
    %161 = vdwg.mxu0
    %v162 = vld [vmem:[#allocation6] sm:$0xff]
    %v163 = vld [vmem:[#allocation6 + $0x8] sm:$0xff]
    %v164 = vmul.f32 %v154, 0.5
    %v165 = vmul.f32 %v159, 0.5
    %v166 = vmul.f32 %v164, 1.442695
    %v167 = vpow.pop %v166
    %v168 = vmul.f32 %v165, 1.442695
    %v169 = vpow.pop %v168
    %172 = vrot.lane.b32.xlu0 %v167, 112
    %v173 = vpop.permute.xlu0 %172
    %174 = vrot.lane.b32.xlu0 %v169, 112
    %v175 = vpop.permute.xlu0 %174
    %v178 = vmul.f32 %v162, %v173
    %v179 = vmul.f32 %v163, %v175
    %v180 = vadd.f32 %v178, %v154
    %v181 = vadd.f32 %v179, %v159
    %v182 = vld [vmem:[%s4] sm:$0x1]
    %v183 = vld [vmem:[#allocation2] sm:$0x1]
    %185 = vset.pattern.permute.xlu0 0
    %186 = vperm.xlu0 %185, %v183
    %v187 = vpop.permute.xlu0 %186
    %v189 = vlaneseq
    %v190 = vshrl.u32 %v189, 7
    %v191 = vsub.s32 0, %v190
    %v192 = vrot.slane %v187, %v191
    %vm193 = vcmask 130048
    %v195 = vsel %vm193, %v182, 0
    %v198 = vsel %vm193, %v180, 0
    %v201 = vsel %vm193, %v181, 0
    %203 = vmatprep.subr.mxu0 0.0
    %204 = vmatpush1.xpose.msra.mxu0 0.0
    %205 = vmatprep.subr.mxu0 0.0
    %206 = vmatpush1.xpose.msra.mxu0 0.0
    %207 = vmatprep.subr.mxu0 0.0
    %208 = vmatpush1.xpose.msra.mxu0 0.0
    %209 = vmatprep.subr.mxu0 0.0
    %210 = vmatpush1.xpose.msra.mxu0 0.0
    %211 = vmatprep.subr.mxu0 0.0
    %212 = vmatpush1.xpose.msra.mxu0 0.0
    %213 = vmatprep.subr.mxu0 0.0
    %214 = vmatpush1.xpose.msra.mxu0 0.0
    %215 = vmatprep.subr.mxu0 0.0
    %216 = vmatpush1.xpose.msra.mxu0 0.0
    %217 = vmatprep.subr.mxu0 0.0
    %218 = vmatpush1.xpose.msra.mxu0 0.0
    %219 = vmatprep.subr.mxu0 0.0
    %220 = vmatpush1.xpose.msra.mxu0 0.0
    %221 = vmatprep.subr.mxu0 0.0
    %222 = vmatpush1.xpose.msra.mxu0 0.0
    %223 = vmatprep.subr.mxu0 0.0
    %224 = vmatpush1.xpose.msra.mxu0 0.0
    %225 = vmatprep.subr.mxu0 0.0
    %226 = vmatpush1.xpose.msra.mxu0 0.0
    %227 = vmatprep.subr.mxu0 0.0
    %228 = vmatpush1.xpose.msra.mxu0 0.0
    %229 = vmatprep.subr.mxu0 0.0
    %230 = vmatpush1.xpose.msra.mxu0 0.0
    %231 = vmatprep.subr.mxu0 0.0
    %232 = vmatpush1.xpose.msra.mxu0 %v201
    %233 = vmatprep.subr.mxu0 0.0
    %234 = vmatpush1.xpose.msra.mxu0 %v198
    %235 = vmatprep.subr.mxu0 0.0
    %236 = vmatpush2.xpose.msra.mxu0 0.0
    %237 = vmatprep.subr.mxu0 0.0
    %238 = vmatpush2.xpose.msra.mxu0 0.0
    %239 = vmatprep.subr.mxu0 0.0
    %240 = vmatpush2.xpose.msra.mxu0 0.0
    %241 = vmatprep.subr.mxu0 0.0
    %242 = vmatpush2.xpose.msra.mxu0 0.0
    %243 = vmatprep.subr.mxu0 0.0
    %244 = vmatpush2.xpose.msra.mxu0 0.0
    %245 = vmatprep.subr.mxu0 0.0
    %246 = vmatpush2.xpose.msra.mxu0 0.0
    %247 = vmatprep.subr.mxu0 0.0
    %248 = vmatpush2.xpose.msra.mxu0 0.0
    %249 = vmatprep.subr.mxu0 0.0
    %250 = vmatpush2.xpose.msra.mxu0 0.0
    %251 = vmatprep.subr.mxu0 0.0
    %252 = vmatpush2.xpose.msra.mxu0 0.0
    %253 = vmatprep.subr.mxu0 0.0
    %254 = vmatpush2.xpose.msra.mxu0 0.0
    %255 = vmatprep.subr.mxu0 0.0
    %256 = vmatpush2.xpose.msra.mxu0 0.0
    %257 = vmatprep.subr.mxu0 0.0
    %258 = vmatpush2.xpose.msra.mxu0 0.0
    %259 = vmatprep.subr.mxu0 0.0
    %260 = vmatpush2.xpose.msra.mxu0 0.0
    %261 = vmatprep.subr.mxu0 0.0
    %262 = vmatpush2.xpose.msra.mxu0 0.0
    %263 = vmatprep.subr.mxu0 0.0
    %264 = vmatpush2.xpose.msra.mxu0 0.0
    %265 = vmatprep.subr.mxu0 0.0
    %266 = vmatpush2.xpose.msra.mxu0 0.0
    %267 = vmatprep.mubr.f32.mxu0 0.0
    %268 = vmatmul.mubr.f32.gmra.mxu0 %v195
    %v269 = vpop.f32.mrf.mxu0
    %v270 = vadd.f32 %v192, %v269
    %v271 = vpop.f32.mrf.mxu0
    %272 = vdwg.mxu0
    %vm273 = vcmask 122880
    %274 = vst.msk [vmem:[#allocation9] sm:$0x1] %vm273, %v270
    // Predicated region
    $region38: #{tpu_custom_call.1} parent=1 // pred_check
      _
    $region39: #{tpu_custom_call.1} parent=1 // pred_check_branch
      %276 = sbr.rel (0) target = $region41
    $region40: #{tpu_custom_call.1} parent=1 // pred_region
      %s278 = ssub.s32 16, 16
      %279 = vsyncadd [#allocation5], %s278
      %s281 = sshll.u32 [#allocation9], 4
      %s282 = int_to_ptr.vmem [resolvable:$true] %s281
      %284 = dma.vmem_to_hbm [thread:$0]  %s282, 16, %s6, [#allocation5]
    $region41: #{tpu_custom_call.1} parent=1 // pred_fallthru
      _
    // Predicated region
    $region42: #{tpu_custom_call.1} parent=1 // pred_check
      _
    $region43: #{tpu_custom_call.1} parent=1 // pred_check_branch
      %286 = sbr.rel (0) target = $region45
    $region44: #{tpu_custom_call.1} parent=1 // pred_region
      %287 = dma.done [#allocation5], 16
    $region45: #{tpu_custom_call.1} parent=1 // pred_fallthru
      _
    %288 = vsyncpa [#allocation4], 1
    %289 = vsyncpa [#allocation7], 1
    %290 = vsyncpa [#allocation5], 1

</llo_original>
